<compile_context>
chip_gen: v5e
topology: v5e:2x2
jax: 0.10.0
libtpu: 0.0.40
codegen_flags: <defaults>
</compile_context>

<pallas_src>
from functools import partial

import jax
import jax.numpy as jnp
from jax.experimental import pallas as pl
from jax.experimental.pallas import tpu as pltpu

NEG_SLOPE = 0.01  # torch.nn.functional.leaky_relu default negative_slope


def _round_up(n, m):
    return ((n + m - 1) // m) * m


def _leaky_relu(x):
    return jnp.where(x > 0, x, NEG_SLOPE * x)


def fc_static_kernel(x_ref, w1_ref, b1_ref, w2_ref, b2_ref, w3_ref, b3_ref,
                     out_ref):
    x = x_ref[...]
    w1 = w1_ref[...]
    w2 = w2_ref[...]
    w3 = w3_ref[...]

    # fc1 + leaky_relu   (K = true Din, unpadded)
    h1 = _leaky_relu(
        jnp.dot(x, w1, preferred_element_type=jnp.float32) + b1_ref[...])

    # fc2 + leaky_relu   (padded lanes stay exactly zero)
    h2 = _leaky_relu(
        jnp.dot(h1.astype(w2.dtype), w2,
                preferred_element_type=jnp.float32) + b2_ref[...])

    # fc3 (no activation).  w3/b3 true columns were placed at a disjoint lane
    # offset at init time, so h2 and o3 occupy disjoint lanes of the packed
    # 128-wide output and packing is a plain add.
    o3 = jnp.dot(h2.astype(w3.dtype), w3,
                 preferred_element_type=jnp.float32) + b3_ref[...]

    out_ref[...] = (h2 + o3).astype(out_ref.dtype)


def pad_params(w1, b1, w2, b2, w3, b3, param_dtype=jnp.float32):
    """One-time init-side padding/packing of the parameters.

    w_i: [in_i, out_i] (already transposed vs. torch), b_i: [1, out_i].
    * Din (w1 rows) is kept unpadded.
    * h1 padded to a multiple of 128.
    * fc2 / fc3 outputs share one packed lane space of width
      round_up(h2 + dout, 128): fc2 columns at [0:h2], fc3 columns at
      [h2:h2+dout].  Zero padding is exact (leaky_relu(0) == 0).
    Weights may be stored in bf16 (param_dtype); biases stay f32.
    """
    din, h1 = w1.shape
    _, h2 = w2.shape
    _, dout = w3.shape
    H1p = _round_up(h1, 128)
    PW = _round_up(h2 + dout, 128)      # packed output lane width
    off = h2                            # lane offset of the static output

    w1p = jnp.zeros((din, H1p), param_dtype).at[:, :h1].set(
        w1.astype(param_dtype))
    b1p = jnp.zeros((1, H1p), jnp.float32).at[:, :h1].set(
        jnp.reshape(b1, (1, -1)))
    w2p = jnp.zeros((H1p, PW), param_dtype).at[:h1, :h2].set(
        w2.astype(param_dtype))
    b2p = jnp.zeros((1, PW), jnp.float32).at[:, :h2].set(
        jnp.reshape(b2, (1, -1)))
    w3p = jnp.zeros((PW, PW), param_dtype).at[:h2, off:off + dout].set(
        w3.astype(param_dtype))
    b3p = jnp.zeros((1, PW), jnp.float32).at[:, off:off + dout].set(
        jnp.reshape(b3, (1, -1)))
    return (w1p, b1p, w2p, b2p, w3p, b3p)


@partial(jax.jit, static_argnames=("true_dims", "block_b"))
def fc_static_forward(x, padded_params, true_dims, *, block_b=1024):
    """x: [B, Din] (unpadded). padded_params: output of pad_params.
    true_dims: (Din, hidden1, hidden2, num_static_out).
    Returns (out_condensed [B, hidden2], out_static [B, num_static_out])."""
    w1, b1, w2, b2, w3, b3 = padded_params
    din, h1_t, h2_t, dout_t = true_dims
    off = h2_t

    B = x.shape[0]
    H1p = w1.shape[1]
    PW = w2.shape[1]

    wdt = w1.dtype
    wbytes = jnp.dtype(wdt).itemsize
    if x.dtype != wdt:
        x = x.astype(wdt)

    # Batch tiling: single tile for small B; for large B cap at block_b and
    # guarantee >= 2 grid steps so v7x shards the batch across both TCs.
    if B <= block_b:
        TB = _round_up(B, 8)
    else:
        TB = min(block_b, _round_up(-(-B // 2), 8))
    Bp = _round_up(B, TB)
    if Bp != B:
        # Pad only the batch remainder (no feature padding of x).
        x = jnp.pad(x, ((0, Bp - B), (0, 0)))

    grid = (Bp // TB,)

    # Advisory cost hint from TRUE (unpadded) dims.
    flops = 2 * B * (din * h1_t + h1_t * h2_t + h2_t * dout_t)
    w_total = din * H1p + H1p * PW + PW * PW
    bytes_accessed = (Bp * din * wbytes           # x in
                      + w_total * wbytes          # weights
                      + (H1p + 2 * PW) * 4        # biases
                      + Bp * PW * 4)              # packed output

    # VMEM budget from the real per-step footprint, with headroom, clamped
    # well below v7x's 64 MiB physical VMEM.
    per_step = (2 * TB * din * wbytes             # x (double-buffered)
                + 2 * TB * PW * 4                 # packed out (double-buffered)
                + TB * (H1p + 2 * PW) * 4         # intermediates (upper bound)
                + 2 * (w_total * wbytes + (H1p + 2 * PW) * 4))
    vmem_limit = int(min(32 * 1024 * 1024,
                         max(8 * 1024 * 1024, 2 * per_step)))

    packed = pl.pallas_call(
        fc_static_kernel,
        out_shape=jax.ShapeDtypeStruct((Bp, PW), jnp.float32),
        grid_spec=pltpu.PrefetchScalarGridSpec(
            num_scalar_prefetch=0,
            grid=grid,
            in_specs=[
                pl.BlockSpec((TB, din), lambda i: (i, 0)),    # x: batch-tiled
                pl.BlockSpec((din, H1p), lambda i: (0, 0)),   # weights/biases:
                pl.BlockSpec((1, H1p), lambda i: (0, 0)),     # VMEM-resident
                pl.BlockSpec((H1p, PW), lambda i: (0, 0)),
                pl.BlockSpec((1, PW), lambda i: (0, 0)),
                pl.BlockSpec((PW, PW), lambda i: (0, 0)),
                pl.BlockSpec((1, PW), lambda i: (0, 0)),
            ],
            out_specs=pl.BlockSpec((TB, PW), lambda i: (i, 0)),
        ),
        compiler_params=pltpu.CompilerParams(
            dimension_semantics=("parallel",),   # v7x: shard batch over 2 TCs
            vmem_limit_bytes=vmem_limit,
        ),
        cost_estimate=pl.CostEstimate(
            flops=flops, transcendentals=0, bytes_accessed=bytes_accessed),
    )(x, w1, b1, w2, b2, w3, b3)

    # Wrapper-side slicing of the packed lane ranges (free layout plumbing).
    return packed[:B, :h2_t], packed[:B, off:off + dout_t]


def init_linear_params(key, fan_in, fan_out):
    """PyTorch-Linear-style init: U(-1/sqrt(fan_in), 1/sqrt(fan_in)).
    Weight returned transposed to [fan_in, fan_out], bias as [1, fan_out]."""
    kw, kb = jax.random.split(key)
    bound = 1.0 / jnp.sqrt(fan_in)
    w = jax.random.uniform(kw, (fan_in, fan_out), jnp.float32, -bound, bound)
    b = jax.random.uniform(kb, (1, fan_out), jnp.float32, -bound, bound)
    return w, b


def reference_forward(x, w1, b1, w2, b2, w3, b3):
    h1 = jax.nn.leaky_relu(x @ w1 + b1, NEG_SLOPE)
    h2 = jax.nn.leaky_relu(h1 @ w2 + b2, NEG_SLOPE)
    return h2, h2 @ w3 + b3


if __name__ == "__main__":
    # Small, module-consistent shapes.
    batch = 2
    num_static_input = 16
    num_static_out = 8
    hidden_size1 = 150
    hidden_size2 = 12
    true_dims = (num_static_input, hidden_size1, hidden_size2, num_static_out)

    key = jax.random.PRNGKey(0)
    kx, k1, k2, k3, kx2 = jax.random.split(key, 5)

    x = jax.random.normal(kx, (batch, num_static_input), jnp.float32)
    w1, b1 = init_linear_params(k1, num_static_input, hidden_size1)
    w2, b2 = init_linear_params(k2, hidden_size1, hidden_size2)
    w3, b3 = init_linear_params(k3, hidden_size2, num_static_out)

    # --- f32 path (exact) -------------------------------------------------
    padded_f32 = pad_params(w1, b1, w2, b2, w3, b3, param_dtype=jnp.float32)
    out_condensed, out_static = fc_static_forward(x, padded_f32, true_dims)
    jax.block_until_ready((out_condensed, out_static))

    ref_cond, ref_static = reference_forward(x, w1, b1, w2, b2, w3, b3)
    assert out_condensed.shape == (batch, hidden_size2)
    assert out_static.shape == (batch, num_static_out)
    assert jnp.allclose(out_condensed, ref_cond, atol=1e-5, rtol=1e-5)
    assert jnp.allclose(out_static, ref_static, atol=1e-5, rtol=1e-5)

    # --- multi-tile path (grid > 1, batch-remainder padding) ---------------
    xb = jax.random.normal(kx2, (50, num_static_input), jnp.float32)
    cond_b, static_b = fc_static_forward(xb, padded_f32, true_dims, block_b=16)
    jax.block_until_ready((cond_b, static_b))
    ref_cond_b, ref_static_b = reference_forward(xb, w1, b1, w2, b2, w3, b3)
    assert jnp.allclose(cond_b, ref_cond_b, atol=1e-5, rtol=1e-5)
    assert jnp.allclose(static_b, ref_static_b, atol=1e-5, rtol=1e-5)

    # --- bf16-stored inputs/weights (f32 accumulation) ----------------------
    padded_bf16 = pad_params(w1, b1, w2, b2, w3, b3, param_dtype=jnp.bfloat16)
    cond_h, static_h = fc_static_forward(x, padded_bf16, true_dims)
    jax.block_until_ready((cond_h, static_h))
    assert jnp.allclose(cond_h, ref_cond, atol=3e-2, rtol=3e-2)
    assert jnp.allclose(static_h, ref_static, atol=3e-2, rtol=3e-2)

    print("KERNEL_OK")
</pallas_src>

<mosaic_0001>
module attributes {stable_mosaic.version = 11 : i64} {
  func.func @fc_static_kernel(%arg0: i32, %arg1: memref<8x16xf32, #tpu.memory_space<vmem>>, %arg2: memref<16x256xf32, #tpu.memory_space<vmem>>, %arg3: memref<1x256xf32, #tpu.memory_space<vmem>>, %arg4: memref<256x128xf32, #tpu.memory_space<vmem>>, %arg5: memref<1x128xf32, #tpu.memory_space<vmem>>, %arg6: memref<128x128xf32, #tpu.memory_space<vmem>>, %arg7: memref<1x128xf32, #tpu.memory_space<vmem>>, %arg8: memref<8x128xf32, #tpu.memory_space<vmem>>) attributes {dimension_semantics = [#tpu.dimension_semantics<parallel>], iteration_bounds = array<i64: 1>, scalar_prefetch = 0 : i64, scratch_operands = 0 : i64, tpu.core_type = #tpu.core_type<tc>, window_params = [{transform_indices = @transform_0, window_bounds = array<i64: 8, 16>}, {pipeline_mode = #tpu.pipeline_mode<synchronous>, transform_indices = @transform_1, window_bounds = array<i64: 16, 256>}, {pipeline_mode = #tpu.pipeline_mode<synchronous>, transform_indices = @transform_2, window_bounds = array<i64: 1, 256>}, {pipeline_mode = #tpu.pipeline_mode<synchronous>, transform_indices = @transform_3, window_bounds = array<i64: 256, 128>}, {pipeline_mode = #tpu.pipeline_mode<synchronous>, transform_indices = @transform_4, window_bounds = array<i64: 1, 128>}, {pipeline_mode = #tpu.pipeline_mode<synchronous>, transform_indices = @transform_5, window_bounds = array<i64: 128, 128>}, {pipeline_mode = #tpu.pipeline_mode<synchronous>, transform_indices = @transform_6, window_bounds = array<i64: 1, 128>}, {transform_indices = @transform_7, window_bounds = array<i64: 8, 128>}]} {
    %c0 = arith.constant 0 : index
    %c0_0 = arith.constant 0 : index
    %0 = vector.load %arg1[%c0, %c0_0] : memref<8x16xf32, #tpu.memory_space<vmem>>, vector<8x16xf32>
    %c0_1 = arith.constant 0 : index
    %c0_2 = arith.constant 0 : index
    %1 = vector.load %arg2[%c0_1, %c0_2] : memref<16x256xf32, #tpu.memory_space<vmem>>, vector<16x256xf32>
    %c0_3 = arith.constant 0 : index
    %c0_4 = arith.constant 0 : index
    %2 = vector.load %arg4[%c0_3, %c0_4] : memref<256x128xf32, #tpu.memory_space<vmem>>, vector<256x128xf32>
    %c0_5 = arith.constant 0 : index
    %c0_6 = arith.constant 0 : index
    %3 = vector.load %arg6[%c0_5, %c0_6] : memref<128x128xf32, #tpu.memory_space<vmem>>, vector<128x128xf32>
    %cst = arith.constant dense<0.000000e+00> : vector<8x256xf32>
    %4 = tpu.matmul %0, %1, %cst {dimension_numbers = #tpu.dot_dimension_numbers<[1], [0], [0], [1], [0, 0, 1, 1], [], []>} : vector<8x16xf32>, vector<16x256xf32>, vector<8x256xf32> -> vector<8x256xf32>
    %c0_7 = arith.constant 0 : index
    %c0_8 = arith.constant 0 : index
    %5 = vector.load %arg3[%c0_7, %c0_8] : memref<1x256xf32, #tpu.memory_space<vmem>>, vector<1x256xf32>
    %6 = vector.broadcast %5 : vector<1x256xf32> to vector<8x256xf32>
    %7 = arith.addf %4, %6 : vector<8x256xf32>
    %cst_9 = arith.constant 0.000000e+00 : f32
    %8 = vector.broadcast %cst_9 : f32 to vector<8x256xf32>
    %9 = arith.cmpf ogt, %7, %8 : vector<8x256xf32>
    %cst_10 = arith.constant 0.00999999977 : f32
    %10 = vector.broadcast %cst_10 : f32 to vector<8x256xf32>
    %11 = arith.mulf %10, %7 : vector<8x256xf32>
    %12 = arith.select %9, %7, %11 : vector<8x256xi1>, vector<8x256xf32>
    %cst_11 = arith.constant dense<0.000000e+00> : vector<8x128xf32>
    %13 = tpu.matmul %12, %2, %cst_11 {dimension_numbers = #tpu.dot_dimension_numbers<[1], [0], [0], [1], [0, 0, 1, 1], [], []>} : vector<8x256xf32>, vector<256x128xf32>, vector<8x128xf32> -> vector<8x128xf32>
    %c0_12 = arith.constant 0 : index
    %c0_13 = arith.constant 0 : index
    %14 = vector.load %arg5[%c0_12, %c0_13] : memref<1x128xf32, #tpu.memory_space<vmem>>, vector<1x128xf32>
    %15 = vector.broadcast %14 : vector<1x128xf32> to vector<8x128xf32>
    %16 = arith.addf %13, %15 : vector<8x128xf32>
    %cst_14 = arith.constant 0.000000e+00 : f32
    %17 = vector.broadcast %cst_14 : f32 to vector<8x128xf32>
    %18 = arith.cmpf ogt, %16, %17 : vector<8x128xf32>
    %cst_15 = arith.constant 0.00999999977 : f32
    %19 = vector.broadcast %cst_15 : f32 to vector<8x128xf32>
    %20 = arith.mulf %19, %16 : vector<8x128xf32>
    %21 = arith.select %18, %16, %20 : vector<8x128xi1>, vector<8x128xf32>
    %cst_16 = arith.constant dense<0.000000e+00> : vector<8x128xf32>
    %22 = tpu.matmul %21, %3, %cst_16 {dimension_numbers = #tpu.dot_dimension_numbers<[1], [0], [0], [1], [0, 0, 1, 1], [], []>} : vector<8x128xf32>, vector<128x128xf32>, vector<8x128xf32> -> vector<8x128xf32>
    %c0_17 = arith.constant 0 : index
    %c0_18 = arith.constant 0 : index
    %23 = vector.load %arg7[%c0_17, %c0_18] : memref<1x128xf32, #tpu.memory_space<vmem>>, vector<1x128xf32>
    %24 = vector.broadcast %23 : vector<1x128xf32> to vector<8x128xf32>
    %25 = arith.addf %22, %24 : vector<8x128xf32>
    %26 = arith.addf %21, %25 : vector<8x128xf32>
    %c0_19 = arith.constant 0 : index
    %c0_20 = arith.constant 0 : index
    %27 = vector.load %arg8[%c0_19, %c0_20] : memref<8x128xf32, #tpu.memory_space<vmem>>, vector<8x128xf32>
    tpu.vector_store %arg8[%c0_19, %c0_20], %26 {strides = array<i32>} : memref<8x128xf32, #tpu.memory_space<vmem>>, vector<8x128xf32>,
    return
  }
  func.func @transform_0(%arg0: i32) -> (i32, i32) {
    %c0_i32 = arith.constant 0 : i32
    %c0_i32_0 = arith.constant 0 : i32
    return %arg0, %c0_i32 : i32, i32
  }
  func.func @transform_1(%arg0: i32) -> (i32, i32) {
    %c0_i32 = arith.constant 0 : i32
    %c0_i32_0 = arith.constant 0 : i32
    %c0_i32_1 = arith.constant 0 : i32
    return %c0_i32, %c0_i32_0 : i32, i32
  }
  func.func @transform_2(%arg0: i32) -> (i32, i32) {
    %c0_i32 = arith.constant 0 : i32
    %c0_i32_0 = arith.constant 0 : i32
    %c0_i32_1 = arith.constant 0 : i32
    return %c0_i32, %c0_i32_0 : i32, i32
  }
  func.func @transform_3(%arg0: i32) -> (i32, i32) {
    %c0_i32 = arith.constant 0 : i32
    %c0_i32_0 = arith.constant 0 : i32
    %c0_i32_1 = arith.constant 0 : i32
    return %c0_i32, %c0_i32_0 : i32, i32
  }
  func.func @transform_4(%arg0: i32) -> (i32, i32) {
    %c0_i32 = arith.constant 0 : i32
    %c0_i32_0 = arith.constant 0 : i32
    %c0_i32_1 = arith.constant 0 : i32
    return %c0_i32, %c0_i32_0 : i32, i32
  }
  func.func @transform_5(%arg0: i32) -> (i32, i32) {
    %c0_i32 = arith.constant 0 : i32
    %c0_i32_0 = arith.constant 0 : i32
    %c0_i32_1 = arith.constant 0 : i32
    return %c0_i32, %c0_i32_0 : i32, i32
  }
  func.func @transform_6(%arg0: i32) -> (i32, i32) {
    %c0_i32 = arith.constant 0 : i32
    %c0_i32_0 = arith.constant 0 : i32
    %c0_i32_1 = arith.constant 0 : i32
    return %c0_i32, %c0_i32_0 : i32, i32
  }
  func.func @transform_7(%arg0: i32) -> (i32, i32) {
    %c0_i32 = arith.constant 0 : i32
    %c0_i32_0 = arith.constant 0 : i32
    return %arg0, %c0_i32 : i32, i32
  }
}

</mosaic_0001>

<llo_original>
// kernel: fc_static_forward.1
$region0: #{fc_static_forward.1}
  #allocation0 [shape = 'u32[]', space=smem, size = 0x4, offset = 0x4, fixed_abs, tag = 'smem constant byte address 0x4 - core index']
  #allocation1 [shape = 'u32[72,128]{1,0:T(1,128)}', space=vmem, size = 0x9000, scoped, tag = 'internal scratch']
  %s0 = inlined_call_operand.vmem [shape: f32[8,16], index: 0, kind: input, shape index: {}]
  %s1 = inlined_call_operand.hbm [shape: f32[16,256], index: 1, kind: input, shape index: {}]
  %s2 = inlined_call_operand.vmem [shape: f32[1,256], index: 2, kind: input, shape index: {}]
  %s3 = inlined_call_operand.hbm [shape: f32[256,128], index: 3, kind: input, shape index: {}]
  %s4 = inlined_call_operand.vmem [shape: f32[1,128], index: 4, kind: input, shape index: {}]
  %s5 = inlined_call_operand.hbm [shape: f32[128,128], index: 5, kind: input, shape index: {}]
  %s6 = inlined_call_operand.vmem [shape: f32[1,128], index: 6, kind: input, shape index: {}]
  %s7 = inlined_call_operand.vmem [shape: f32[8,128], index: 7, kind: output, shape index: {}]
  %s8 = sld [smem:[#allocation0]]
  $region50: #{fc_static_forward.1} parent=0
    _
  %s10 = ssub.s32 1, %s8
  %s11 = scalar_select 0, %s10, %s8
  $region1: #{fc_static_forward.1} parent=0
    #allocation2 [shape = 'u8[16384]{0}', space=vmem, size = 0x4000, scoped, tag = 'input window, operand 1, single buffered']
    #allocation3 [shape = 's32[1]{0}', space=sflag, size = 0x4, scoped, tag = 'scoped memory for fc_static_forward.1']
    #allocation4 [shape = 'u8[131072]{0}', space=vmem, size = 0x20000, scoped, tag = 'input window, operand 3, single buffered']
    #allocation5 [shape = 's32[1]{0}', space=sflag, size = 0x4, scoped, tag = 'scoped memory for fc_static_forward.1']
    #allocation6 [shape = 'u8[65536]{0}', space=vmem, size = 0x10000, scoped, tag = 'input window, operand 5, single buffered']
    %12 = vsyncpa [#allocation3], 0
    %13 = vsyncpa [#allocation5], 0
    // Predicated region
    $region2: #{fc_static_forward.1} parent=1 // pred_check
      _
    $region3: #{fc_static_forward.1} parent=1 // pred_check_branch
      %15 = sbr.rel (0) target = $region5
    $region4: #{fc_static_forward.1} parent=1 // pred_region
      _
    $region5: #{fc_static_forward.1} parent=1 // pred_fallthru
      _
    // Predicated region
    $region6: #{fc_static_forward.1} parent=1 // pred_check
      _
    $region7: #{fc_static_forward.1} parent=1 // pred_check_branch
      %17 = sbr.rel (0) target = $region9
    $region8: #{fc_static_forward.1} parent=1 // pred_region
      %19 = vsyncadd [#allocation3], 0
      %s20 = sshll.u32 %s1, 4
      %s21 = int_to_ptr.hbm [resolvable:$true] %s20
      %s22 = sshll.u32 [#allocation2], 4
      %s23 = int_to_ptr.vmem [resolvable:$true] %s22
      %28 = dma.hbm_to_vmem [thread:$0]  %s21, 512, %s23, [#allocation3], 256, 256, 16
    $region9: #{fc_static_forward.1} parent=1 // pred_fallthru
      _
    // Predicated region
    $region10: #{fc_static_forward.1} parent=1 // pred_check
      _
    $region11: #{fc_static_forward.1} parent=1 // pred_check_branch
      %30 = sbr.rel (0) target = $region13
    $region12: #{fc_static_forward.1} parent=1 // pred_region
      _
    $region13: #{fc_static_forward.1} parent=1 // pred_fallthru
      _
    // Predicated region
    $region14: #{fc_static_forward.1} parent=1 // pred_check
      _
    $region15: #{fc_static_forward.1} parent=1 // pred_check_branch
      %32 = sbr.rel (0) target = $region17
    $region16: #{fc_static_forward.1} parent=1 // pred_region
      %34 = vsyncadd [#allocation5], 0
      %s35 = sshll.u32 %s3, 4
      %s36 = int_to_ptr.hbm [resolvable:$true] %s35
      %s37 = sshll.u32 [#allocation4], 4
      %s38 = int_to_ptr.vmem [resolvable:$true] %s37
      %43 = dma.hbm_to_vmem [thread:$0]  %s36, 4096, %s38, [#allocation5], 128, 128, 8
    $region17: #{fc_static_forward.1} parent=1 // pred_fallthru
      _
    // Predicated region
    $region18: #{fc_static_forward.1} parent=1 // pred_check
      _
    $region19: #{fc_static_forward.1} parent=1 // pred_check_branch
      %45 = sbr.rel (0) target = $region21
    $region20: #{fc_static_forward.1} parent=1 // pred_region
      _
    $region21: #{fc_static_forward.1} parent=1 // pred_fallthru
      _
    // Predicated region
    $region22: #{fc_static_forward.1} parent=1 // pred_check
      _
    $region23: #{fc_static_forward.1} parent=1 // pred_check_branch
      %47 = sbr.rel (0) target = $region25
    $region24: #{fc_static_forward.1} parent=1 // pred_region
      %49 = vsyncadd [#allocation5], 0
      %s50 = sshll.u32 %s5, 4
      %s51 = int_to_ptr.hbm [resolvable:$true] %s50
      %s52 = sshll.u32 [#allocation6], 4
      %s53 = int_to_ptr.vmem [resolvable:$true] %s52
      %58 = dma.hbm_to_vmem [thread:$0]  %s51, 2048, %s53, [#allocation5], 128, 128, 8
    $region25: #{fc_static_forward.1} parent=1 // pred_fallthru
      _
    // Predicated region
    $region26: #{fc_static_forward.1} parent=1 // pred_check
      _
    $region27: #{fc_static_forward.1} parent=1 // pred_check_branch
      %60 = sbr.rel (0) target = $region29
    $region28: #{fc_static_forward.1} parent=1 // pred_region
      _
    $region29: #{fc_static_forward.1} parent=1 // pred_fallthru
      _
    // Predicated region
    $region30: #{fc_static_forward.1} parent=1 // pred_check
      _
    $region31: #{fc_static_forward.1} parent=1 // pred_check_branch
      %62 = sbr.rel (0) target = $region33
    $region32: #{fc_static_forward.1} parent=1 // pred_region
      %64 = dma.done [#allocation3], 512
    $region33: #{fc_static_forward.1} parent=1 // pred_fallthru
      _
    // Predicated region
    $region34: #{fc_static_forward.1} parent=1 // pred_check
      _
    $region35: #{fc_static_forward.1} parent=1 // pred_check_branch
      %66 = sbr.rel (0) target = $region37
    $region36: #{fc_static_forward.1} parent=1 // pred_region
      %68 = dma.done [#allocation5], 4096
    $region37: #{fc_static_forward.1} parent=1 // pred_fallthru
      _
    // Predicated region
    $region38: #{fc_static_forward.1} parent=1 // pred_check
      _
    $region39: #{fc_static_forward.1} parent=1 // pred_check_branch
      %70 = sbr.rel (0) target = $region41
    $region40: #{fc_static_forward.1} parent=1 // pred_region
      %72 = dma.done [#allocation5], 2048
    $region41: #{fc_static_forward.1} parent=1 // pred_fallthru
      _
    %v73 = vld [vmem:[%s0] sm:$0xff]
    %v74 = vld [vmem:[#allocation2] sm:$0xff]
    %v75 = vld [vmem:[#allocation2 + $0x8] sm:$0xff]
    %v76 = vld [vmem:[#allocation2 + $0x10] sm:$0xff]
    %v77 = vld [vmem:[#allocation2 + $0x18] sm:$0xff]
    %v78 = vld [vmem:[#allocation4] sm:$0xff]
    %v79 = vld [vmem:[#allocation4 + $0x8] sm:$0xff]
    %v80 = vld [vmem:[#allocation4 + $0x10] sm:$0xff]
    %v81 = vld [vmem:[#allocation4 + $0x18] sm:$0xff]
    %v82 = vld [vmem:[#allocation4 + $0x20] sm:$0xff]
    %v83 = vld [vmem:[#allocation4 + $0x28] sm:$0xff]
    %v84 = vld [vmem:[#allocation4 + $0x30] sm:$0xff]
    %v85 = vld [vmem:[#allocation4 + $0x38] sm:$0xff]
    %v86 = vld [vmem:[#allocation4 + $0x40] sm:$0xff]
    %v87 = vld [vmem:[#allocation4 + $0x48] sm:$0xff]
    %v88 = vld [vmem:[#allocation4 + $0x50] sm:$0xff]
    %v89 = vld [vmem:[#allocation4 + $0x58] sm:$0xff]
    %v90 = vld [vmem:[#allocation4 + $0x60] sm:$0xff]
    %v91 = vld [vmem:[#allocation4 + $0x68] sm:$0xff]
    %v92 = vld [vmem:[#allocation4 + $0x70] sm:$0xff]
    %v93 = vld [vmem:[#allocation4 + $0x78] sm:$0xff]
    %v94 = vld [vmem:[#allocation4 + $0x80] sm:$0xff]
    %v95 = vld [vmem:[#allocation4 + $0x88] sm:$0xff]
    %v96 = vld [vmem:[#allocation4 + $0x90] sm:$0xff]
    %v97 = vld [vmem:[#allocation4 + $0x98] sm:$0xff]
    %v98 = vld [vmem:[#allocation4 + $0xa0] sm:$0xff]
    %v99 = vld [vmem:[#allocation4 + $0xa8] sm:$0xff]
    %v100 = vld [vmem:[#allocation4 + $0xb0] sm:$0xff]
    %v101 = vld [vmem:[#allocation4 + $0xb8] sm:$0xff]
    %v102 = vld [vmem:[#allocation4 + $0xc0] sm:$0xff]
    %v103 = vld [vmem:[#allocation4 + $0xc8] sm:$0xff]
    %v104 = vld [vmem:[#allocation4 + $0xd0] sm:$0xff]
    %v105 = vld [vmem:[#allocation4 + $0xd8] sm:$0xff]
    %v106 = vld [vmem:[#allocation4 + $0xe0] sm:$0xff]
    %v107 = vld [vmem:[#allocation4 + $0xe8] sm:$0xff]
    %v108 = vld [vmem:[#allocation4 + $0xf0] sm:$0xff]
    %v109 = vld [vmem:[#allocation4 + $0xf8] sm:$0xff]
    %v110 = vld [vmem:[#allocation6] sm:$0xff]
    %v111 = vld [vmem:[#allocation6 + $0x8] sm:$0xff]
    %v112 = vld [vmem:[#allocation6 + $0x10] sm:$0xff]
    %v113 = vld [vmem:[#allocation6 + $0x18] sm:$0xff]
    %v114 = vld [vmem:[#allocation6 + $0x20] sm:$0xff]
    %v115 = vld [vmem:[#allocation6 + $0x28] sm:$0xff]
    %v116 = vld [vmem:[#allocation6 + $0x30] sm:$0xff]
    %v117 = vld [vmem:[#allocation6 + $0x38] sm:$0xff]
    %v118 = vld [vmem:[#allocation6 + $0x40] sm:$0xff]
    %v119 = vld [vmem:[#allocation6 + $0x48] sm:$0xff]
    %v120 = vld [vmem:[#allocation6 + $0x50] sm:$0xff]
    %v121 = vld [vmem:[#allocation6 + $0x58] sm:$0xff]
    %v122 = vld [vmem:[#allocation6 + $0x60] sm:$0xff]
    %v123 = vld [vmem:[#allocation6 + $0x68] sm:$0xff]
    %v124 = vld [vmem:[#allocation6 + $0x70] sm:$0xff]
    %v125 = vld [vmem:[#allocation6 + $0x78] sm:$0xff]
    %v126 = vld [vmem:[%s2] sm:$0x3]
    %v128 = vperm.slane %v126, 0
    %v129 = vperm.slane %v126, 1
    %vm132 = vcmask 130048
    %v134 = vsel %vm132, %v73, 0
    %136 = vmatpush.msra.mxu0 0.0
    %137 = vmatpush.msra.mxu0 0.0
    %138 = vmatpush.msra.mxu0 0.0
    %139 = vmatpush.msra.mxu0 0.0
    %140 = vmatpush.msra.mxu0 0.0
    %141 = vmatpush.msra.mxu0 0.0
    %142 = vmatpush.msra.mxu0 0.0
    %143 = vmatpush.msra.mxu0 0.0
    %144 = vmatpush.msra.mxu0 0.0
    %145 = vmatpush.msra.mxu0 0.0
    %146 = vmatpush.msra.mxu0 0.0
    %147 = vmatpush.msra.mxu0 0.0
    %148 = vmatpush.msra.mxu0 0.0
    %149 = vmatpush.msra.mxu0 0.0
    %150 = vmatpush.msra.mxu0 %v76
    %151 = vmatpush.msra.mxu0 %v74
    %152 = vmatmul.f32.gmra.mxu0 %v134
    %v153 = vpop.f32.mrf.mxu0
    %v154 = vadd.f32 %v128, %v153
    %155 = vdwg.mxu0
    %156 = vmatpush.msra.mxu0 0.0
    %157 = vmatpush.msra.mxu0 0.0
    %158 = vmatpush.msra.mxu0 0.0
    %159 = vmatpush.msra.mxu0 0.0
    %160 = vmatpush.msra.mxu0 0.0
    %161 = vmatpush.msra.mxu0 0.0
    %162 = vmatpush.msra.mxu0 0.0
    %163 = vmatpush.msra.mxu0 0.0
    %164 = vmatpush.msra.mxu0 0.0
    %165 = vmatpush.msra.mxu0 0.0
    %166 = vmatpush.msra.mxu0 0.0
    %167 = vmatpush.msra.mxu0 0.0
    %168 = vmatpush.msra.mxu0 0.0
    %169 = vmatpush.msra.mxu0 0.0
    %170 = vmatpush.msra.mxu0 %v77
    %171 = vmatpush.msra.mxu0 %v75
    %172 = vmatmul.f32.gmra.mxu0 %v134
    %v173 = vpop.f32.mrf.mxu0
    %v174 = vadd.f32 %v129, %v173
    %175 = vdwg.mxu0
    %vm176 = vcmp.gt.f32.partialorder %v154, 0.0
    %vm177 = vcmp.gt.f32.partialorder %v174, 0.0
    %v178 = vmul.f32 %v154, 0.01
    %v179 = vmul.f32 %v174, 0.01
    %v180 = vsel %vm176, %v154, %v178
    %v181 = vsel %vm177, %v174, %v179
    %v182 = vld [vmem:[%s4] sm:$0x1]
    %v184 = vperm.slane %v182, 0
    %186 = vmatpush.msra.mxu0 %v93
    %187 = vmatpush.msra.mxu0 %v92
    %188 = vmatpush.msra.mxu0 %v91
    %189 = vmatpush.msra.mxu0 %v90
    %190 = vmatpush.msra.mxu0 %v89
    %191 = vmatpush.msra.mxu0 %v88
    %192 = vmatpush.msra.mxu0 %v87
    %193 = vmatpush.msra.mxu0 %v86
    %194 = vmatpush.msra.mxu0 %v85
    %195 = vmatpush.msra.mxu0 %v84
    %196 = vmatpush.msra.mxu0 %v83
    %197 = vmatpush.msra.mxu0 %v82
    %198 = vmatpush.msra.mxu0 %v81
    %199 = vmatpush.msra.mxu0 %v80
    %200 = vmatpush.msra.mxu0 %v79
    %201 = vmatpush.msra.mxu0 %v78
    %202 = vmatmul.f32.gmra.mxu0 %v180
    %v203 = vpop.f32.mrf.mxu0
    %v204 = vadd.f32 %v184, %v203
    %205 = vdwg.mxu0
    %206 = vmatpush.msra.mxu0 %v109
    %207 = vmatpush.msra.mxu0 %v108
    %208 = vmatpush.msra.mxu0 %v107
    %209 = vmatpush.msra.mxu0 %v106
    %210 = vmatpush.msra.mxu0 %v105
    %211 = vmatpush.msra.mxu0 %v104
    %212 = vmatpush.msra.mxu0 %v103
    %213 = vmatpush.msra.mxu0 %v102
    %214 = vmatpush.msra.mxu0 %v101
    %215 = vmatpush.msra.mxu0 %v100
    %216 = vmatpush.msra.mxu0 %v99
    %217 = vmatpush.msra.mxu0 %v98
    %218 = vmatpush.msra.mxu0 %v97
    %219 = vmatpush.msra.mxu0 %v96
    %220 = vmatpush.msra.mxu0 %v95
    %221 = vmatpush.msra.mxu0 %v94
    %222 = vmatmul.f32.gmra.mxu0 %v181
    %v223 = vpop.f32.mrf.mxu0
    %v224 = vadd.f32 %v204, %v223
    %225 = vdwg.mxu0
    %vm226 = vcmp.gt.f32.partialorder %v224, 0.0
    %v227 = vmul.f32 %v224, 0.01
    %v228 = vsel %vm226, %v224, %v227
    %v229 = vld [vmem:[%s6] sm:$0x1]
    %v231 = vperm.slane %v229, 0
    %233 = vmatpush.msra.mxu0 %v125
    %234 = vmatpush.msra.mxu0 %v124
    %235 = vmatpush.msra.mxu0 %v123
    %236 = vmatpush.msra.mxu0 %v122
    %237 = vmatpush.msra.mxu0 %v121
    %238 = vmatpush.msra.mxu0 %v120
    %239 = vmatpush.msra.mxu0 %v119
    %240 = vmatpush.msra.mxu0 %v118
    %241 = vmatpush.msra.mxu0 %v117
    %242 = vmatpush.msra.mxu0 %v116
    %243 = vmatpush.msra.mxu0 %v115
    %244 = vmatpush.msra.mxu0 %v114
    %245 = vmatpush.msra.mxu0 %v113
    %246 = vmatpush.msra.mxu0 %v112
    %247 = vmatpush.msra.mxu0 %v111
    %248 = vmatpush.msra.mxu0 %v110
    %249 = vmatmul.f32.gmra.mxu0 %v228
    %v250 = vpop.f32.mrf.mxu0
    %v251 = vadd.f32 %v231, %v250
    %252 = vdwg.mxu0
    %v253 = vadd.f32 %v228, %v251
    %254 = vst [vmem:[%s7] sm:$0xff] %v253
    // Predicated region
    $region42: #{fc_static_forward.1} parent=1 // pred_check
      _
    $region43: #{fc_static_forward.1} parent=1 // pred_check_branch
      %256 = sbr.rel (0) target = $region45
    $region44: #{fc_static_forward.1} parent=1 // pred_region
      _
    $region45: #{fc_static_forward.1} parent=1 // pred_fallthru
      _
    // Predicated region
    $region46: #{fc_static_forward.1} parent=1 // pred_check
      _
    $region47: #{fc_static_forward.1} parent=1 // pred_check_branch
      %258 = sbr.rel (0) target = $region49
    $region48: #{fc_static_forward.1} parent=1 // pred_region
      _
    $region49: #{fc_static_forward.1} parent=1 // pred_fallthru
      _
    %259 = vsyncpa [#allocation3], 1
    %260 = vsyncpa [#allocation5], 1

</llo_original>
